<compile_context>
chip_gen: v7x
topology: tpu7x:2x2x1
jax: 0.10.0
libtpu: 0.0.40
codegen_flags: <defaults>
</compile_context>

<pallas_src>
import jax
import jax.numpy as jnp
from jax.experimental import pallas as pl
from jax.experimental.pallas import tpu as pltpu

LANES = 128


# ---------------------------------------------------------------------------
# Kernel
# ---------------------------------------------------------------------------
def _deeponet_fusion2_kernel(x_ref, w_ref, out_ref):
    """x_ref: (TILE_B, 128) = [bf | bn | tr | 1 | 0...] packed on the lanes.
    w_ref: (4, 128, 128) block-diagonal weight slabs with biases folded in
           via the "ones" row and a 1.0 passthrough that re-creates the ones
           column for the next layer.
    out_ref: (TILE_B, 1)."""
    f32 = jnp.float32
    x = x_ref[...]

    # Fused first Linears of branch_f/branch_n/trunk (+ biases) + ReLU.
    # lanes of h1: [h_f | h_n | h_t | 1 | 0...]
    h1 = jnp.maximum(jnp.dot(x, w_ref[0], preferred_element_type=f32), 0.0)

    # Fused second Linears (+ biases), no activation.
    # lanes of a2: [trunk | branch_f | branch_n | 1 | 0...]
    a2 = jnp.dot(h1, w_ref[1], preferred_element_type=f32)

    # fusion_mlp layer 1 on cat([branch_f, branch_n]) (+ bias) + ReLU;
    # the concat is realised by row placement in w_ref[2].
    # lanes of h3: [h_u | 1 | 0...]
    h3 = jnp.maximum(jnp.dot(a2, w_ref[2], preferred_element_type=f32), 0.0)

    # fusion_mlp layer 2 (+ bias).  lanes of fused: [fused | 0...], where the
    # nonzero lanes 0:P line up with the trunk lanes 0:P of a2.
    fused = jnp.dot(h3, w_ref[3], preferred_element_type=f32)

    # sum(fused * trunk, -1, keepdim=True): fused is exactly zero outside its
    # P lanes, so the full-lane product+reduce equals the reference reduction.
    # Kept as an XLU lane reduce (otherwise-idle unit) rather than a matmul.
    out_ref[...] = jnp.sum(fused * a2, axis=-1, keepdims=True)


# ---------------------------------------------------------------------------
# Wrapper
# ---------------------------------------------------------------------------
def deeponet_fusion2(x_packed, w_slab, *, tile_b=None):
    """x_packed: (B, 128) packed activations; w_slab: (4, 128, 128)."""
    B = x_packed.shape[0]
    if tile_b is None:
        tile_b = B if B <= 256 else 256
    assert B % tile_b == 0 and tile_b % 8 == 0, (B, tile_b)
    grid = (B // tile_b,)
    return pl.pallas_call(
        _deeponet_fusion2_kernel,
        out_shape=jax.ShapeDtypeStruct((B, 1), jnp.float32),
        grid_spec=pltpu.PrefetchScalarGridSpec(
            num_scalar_prefetch=0,
            grid=grid,
            in_specs=[
                pl.BlockSpec((tile_b, LANES), lambda i: (i, 0)),
                # Constant index_map -> weight slab stays VMEM-resident.
                pl.BlockSpec((4, LANES, LANES), lambda i: (0, 0, 0)),
            ],
            out_specs=pl.BlockSpec((tile_b, 1), lambda i: (i, 0)),
        ),
        compiler_params=pltpu.CompilerParams(
            dimension_semantics=("parallel",)),
    )(x_packed, w_slab)


# ---------------------------------------------------------------------------
# Host-side packing (done once for weights; cheap per-call for activations)
# ---------------------------------------------------------------------------
def pack_inputs(bf, bn, tr):
    B = bf.shape[0]
    d_f, d_n, d_t = bf.shape[1], bn.shape[1], tr.shape[1]
    assert d_f + d_n + d_t + 1 <= LANES
    x = jnp.zeros((B, LANES), jnp.float32)
    x = x.at[:, :d_f].set(bf)
    x = x.at[:, d_f:d_f + d_n].set(bn)
    x = x.at[:, d_f + d_n:d_f + d_n + d_t].set(tr)
    x = x.at[:, d_f + d_n + d_t].set(1.0)     # bias / "ones" column
    return x


def pack_weights(p, d_f, d_n, d_t, hidden, p_out):
    H, P = hidden, p_out
    assert d_f + d_n + d_t + 1 <= LANES
    assert 3 * H + 1 <= LANES and 3 * P + 1 <= LANES and H + 1 <= LANES
    W = jnp.zeros((4, LANES, LANES), jnp.float32)

    # slab 0: block-diag [wf1 | wn1 | wt1]; biases on the ones row; 1.0 passthrough
    r1 = d_f + d_n + d_t                      # ones row of the input slab
    W = W.at[0, 0:d_f, 0:H].set(p["wf1"])
    W = W.at[0, d_f:d_f + d_n, H:2 * H].set(p["wn1"])
    W = W.at[0, d_f + d_n:r1, 2 * H:3 * H].set(p["wt1"])
    W = W.at[0, r1, 0:H].set(p["bf1"])
    W = W.at[0, r1, H:2 * H].set(p["bn1"])
    W = W.at[0, r1, 2 * H:3 * H].set(p["bt1"])
    W = W.at[0, r1, 3 * H].set(1.0)

    # slab 1: output lanes = [trunk | branch_f | branch_n | 1]
    r2 = 3 * H                                # ones row of h1
    W = W.at[1, 2 * H:3 * H, 0:P].set(p["wt2"])
    W = W.at[1, 0:H, P:2 * P].set(p["wf2"])
    W = W.at[1, H:2 * H, 2 * P:3 * P].set(p["wn2"])
    W = W.at[1, r2, 0:P].set(p["bt2"])
    W = W.at[1, r2, P:2 * P].set(p["bf2"])
    W = W.at[1, r2, 2 * P:3 * P].set(p["bn2"])
    W = W.at[1, r2, 3 * P].set(1.0)

    # slab 2: fusion layer 1; cat([branch_f, branch_n]) via row placement
    # (rows 0:P = trunk lanes are left zero -> trunk does not leak in).
    r3 = 3 * P                                # ones row of a2
    W = W.at[2, P:2 * P, 0:H].set(p["wu1"][0:P])
    W = W.at[2, 2 * P:3 * P, 0:H].set(p["wu1"][P:2 * P])
    W = W.at[2, r3, 0:H].set(p["bu1"])
    W = W.at[2, r3, H].set(1.0)

    # slab 3: fusion layer 2; output lanes 0:P align with trunk lanes of a2.
    W = W.at[3, 0:H, 0:P].set(p["wu2"])
    W = W.at[3, H, 0:P].set(p["bu2"])
    return W


# ---------------------------------------------------------------------------
# Parameters + pure-JAX reference (mirrors the PyTorch forward exactly)
# ---------------------------------------------------------------------------
def _init_params(key, d_f, d_n, d_t, hidden, p_out):
    ks = jax.random.split(key, 16)

    def lin(kw, kb, din, dout):
        w = jax.random.normal(kw, (din, dout), jnp.float32) / jnp.sqrt(din)
        b = 0.1 * jax.random.normal(kb, (dout,), jnp.float32)
        return w, b

    wf1, bf1 = lin(ks[0], ks[1], d_f, hidden)
    wf2, bf2 = lin(ks[2], ks[3], hidden, p_out)
    wn1, bn1 = lin(ks[4], ks[5], d_n, hidden)
    wn2, bn2 = lin(ks[6], ks[7], hidden, p_out)
    wt1, bt1 = lin(ks[8], ks[9], d_t, hidden)
    wt2, bt2 = lin(ks[10], ks[11], hidden, p_out)
    wu1, bu1 = lin(ks[12], ks[13], 2 * p_out, hidden)
    wu2, bu2 = lin(ks[14], ks[15], hidden, p_out)
    return dict(wf1=wf1, bf1=bf1, wf2=wf2, bf2=bf2,
                wn1=wn1, bn1=bn1, wn2=wn2, bn2=bn2,
                wt1=wt1, bt1=bt1, wt2=wt2, bt2=bt2,
                wu1=wu1, bu1=bu1, wu2=wu2, bu2=bu2)


def _reference(bf, bn, tr, p):
    relu = lambda x: jnp.maximum(x, 0.0)
    branch_f = relu(bf @ p["wf1"] + p["bf1"]) @ p["wf2"] + p["bf2"]
    branch_n = relu(bn @ p["wn1"] + p["bn1"]) @ p["wn2"] + p["bn2"]
    trunk = relu(tr @ p["wt1"] + p["bt1"]) @ p["wt2"] + p["bt2"]
    fusion_in = jnp.concatenate([branch_f, branch_n], axis=1)
    fused = relu(fusion_in @ p["wu1"] + p["bu1"]) @ p["wu2"] + p["bu2"]
    return jnp.sum(fused * trunk, axis=-1, keepdims=True)


if __name__ == "__main__":
    B, D_F, D_N, D_T, HIDDEN, P = 8, 16, 8, 2, 32, 16

    key = jax.random.PRNGKey(0)
    k_bf, k_bn, k_tr, k_par = jax.random.split(key, 4)

    branch_f_input = jax.random.normal(k_bf, (B, D_F), jnp.float32)
    branch_n_input = jax.random.normal(k_bn, (B, D_N), jnp.float32)
    trunk_input = jax.random.normal(k_tr, (B, D_T), jnp.float32)

    params = _init_params(k_par, D_F, D_N, D_T, HIDDEN, P)
    w_slab = pack_weights(params, D_F, D_N, D_T, HIDDEN, P)       # once, at init
    x_packed = pack_inputs(branch_f_input, branch_n_input, trunk_input)

    out = deeponet_fusion2(x_packed, w_slab)
    out = jax.block_until_ready(out)

    ref = _reference(branch_f_input, branch_n_input, trunk_input, params)
    assert out.shape == (B, 1), out.shape
    assert jnp.allclose(out, ref, atol=1e-3, rtol=1e-3), (out, ref)

    print("KERNEL_OK")
</pallas_src>

<mosaic_0001>
module attributes {stable_mosaic.version = 11 : i64} {
  func.func @_deeponet_fusion2_kernel(%arg0: i32, %arg1: memref<8x128xf32, #tpu.memory_space<vmem>>, %arg2: memref<4x128x128xf32, #tpu.memory_space<vmem>>, %arg3: memref<8x1xf32, #tpu.memory_space<vmem>>) attributes {dimension_semantics = [#tpu.dimension_semantics<parallel>], iteration_bounds = array<i64: 1>, scalar_prefetch = 0 : i64, scratch_operands = 0 : i64, tpu.core_type = #tpu.core_type<tc>, window_params = [{transform_indices = @transform_0, window_bounds = array<i64: 8, 128>}, {pipeline_mode = #tpu.pipeline_mode<synchronous>, transform_indices = @transform_1, window_bounds = array<i64: 4, 128, 128>}, {transform_indices = @transform_2, window_bounds = array<i64: 8, 1>}]} {
    %c0 = arith.constant 0 : index
    %c0_0 = arith.constant 0 : index
    %0 = vector.load %arg1[%c0, %c0_0] : memref<8x128xf32, #tpu.memory_space<vmem>>, vector<8x128xf32>
    %c0_1 = arith.constant 0 : index
    %c0_2 = arith.constant 0 : index
    %c0_3 = arith.constant 0 : index
    %1 = vector.load %arg2[%c0_1, %c0_2, %c0_3] : memref<4x128x128xf32, #tpu.memory_space<vmem>>, vector<1x128x128xf32>
    %2 = vector.shape_cast %1 : vector<1x128x128xf32> to vector<128x128xf32>
    %cst = arith.constant dense<0.000000e+00> : vector<8x128xf32>
    %3 = tpu.matmul %0, %2, %cst {dimension_numbers = #tpu.dot_dimension_numbers<[1], [0], [0], [1], [0, 0, 1, 1], [], []>} : vector<8x128xf32>, vector<128x128xf32>, vector<8x128xf32> -> vector<8x128xf32>
    %cst_4 = arith.constant 0.000000e+00 : f32
    %4 = vector.broadcast %cst_4 : f32 to vector<8x128xf32>
    %5 = arith.maximumf %3, %4 : vector<8x128xf32>
    %c1 = arith.constant 1 : index
    %c0_5 = arith.constant 0 : index
    %c0_6 = arith.constant 0 : index
    %6 = vector.load %arg2[%c1, %c0_5, %c0_6] : memref<4x128x128xf32, #tpu.memory_space<vmem>>, vector<1x128x128xf32>
    %7 = vector.shape_cast %6 : vector<1x128x128xf32> to vector<128x128xf32>
    %cst_7 = arith.constant dense<0.000000e+00> : vector<8x128xf32>
    %8 = tpu.matmul %5, %7, %cst_7 {dimension_numbers = #tpu.dot_dimension_numbers<[1], [0], [0], [1], [0, 0, 1, 1], [], []>} : vector<8x128xf32>, vector<128x128xf32>, vector<8x128xf32> -> vector<8x128xf32>
    %c2 = arith.constant 2 : index
    %c0_8 = arith.constant 0 : index
    %c0_9 = arith.constant 0 : index
    %9 = vector.load %arg2[%c2, %c0_8, %c0_9] : memref<4x128x128xf32, #tpu.memory_space<vmem>>, vector<1x128x128xf32>
    %10 = vector.shape_cast %9 : vector<1x128x128xf32> to vector<128x128xf32>
    %cst_10 = arith.constant dense<0.000000e+00> : vector<8x128xf32>
    %11 = tpu.matmul %8, %10, %cst_10 {dimension_numbers = #tpu.dot_dimension_numbers<[1], [0], [0], [1], [0, 0, 1, 1], [], []>} : vector<8x128xf32>, vector<128x128xf32>, vector<8x128xf32> -> vector<8x128xf32>
    %cst_11 = arith.constant 0.000000e+00 : f32
    %12 = vector.broadcast %cst_11 : f32 to vector<8x128xf32>
    %13 = arith.maximumf %11, %12 : vector<8x128xf32>
    %c3 = arith.constant 3 : index
    %c0_12 = arith.constant 0 : index
    %c0_13 = arith.constant 0 : index
    %14 = vector.load %arg2[%c3, %c0_12, %c0_13] : memref<4x128x128xf32, #tpu.memory_space<vmem>>, vector<1x128x128xf32>
    %15 = vector.shape_cast %14 : vector<1x128x128xf32> to vector<128x128xf32>
    %cst_14 = arith.constant dense<0.000000e+00> : vector<8x128xf32>
    %16 = tpu.matmul %13, %15, %cst_14 {dimension_numbers = #tpu.dot_dimension_numbers<[1], [0], [0], [1], [0, 0, 1, 1], [], []>} : vector<8x128xf32>, vector<128x128xf32>, vector<8x128xf32> -> vector<8x128xf32>
    %17 = arith.mulf %16, %8 : vector<8x128xf32>
    %cst_15 = arith.constant dense<0.000000e+00> : vector<8xf32>
    %18 = vector.multi_reduction <add>, %17, %cst_15 [1] : vector<8x128xf32> to vector<8xf32>
    %19 = vector.shape_cast %18 : vector<8xf32> to vector<8x1xf32>
    %c0_16 = arith.constant 0 : index
    %c0_17 = arith.constant 0 : index
    %20 = vector.load %arg3[%c0_16, %c0_17] : memref<8x1xf32, #tpu.memory_space<vmem>>, vector<8x1xf32>
    tpu.vector_store %arg3[%c0_16, %c0_17], %19 {strides = array<i32>} : memref<8x1xf32, #tpu.memory_space<vmem>>, vector<8x1xf32>,
    return
  }
  func.func @transform_0(%arg0: i32) -> (i32, i32) {
    %c0_i32 = arith.constant 0 : i32
    %c0_i32_0 = arith.constant 0 : i32
    return %arg0, %c0_i32 : i32, i32
  }
  func.func @transform_1(%arg0: i32) -> (i32, i32, i32) {
    %c0_i32 = arith.constant 0 : i32
    %c0_i32_0 = arith.constant 0 : i32
    %c0_i32_1 = arith.constant 0 : i32
    %c0_i32_2 = arith.constant 0 : i32
    return %c0_i32, %c0_i32_0, %c0_i32_1 : i32, i32, i32
  }
  func.func @transform_2(%arg0: i32) -> (i32, i32) {
    %c0_i32 = arith.constant 0 : i32
    %c0_i32_0 = arith.constant 0 : i32
    return %arg0, %c0_i32 : i32, i32
  }
}

</mosaic_0001>

<llo_original>
// kernel: tpu_custom_call.1
$region0: #{tpu_custom_call.1}
  #allocation0 [shape = 'u32[]', space=smem, size = 0x4, offset = 0x4, fixed_abs, tag = 'smem constant byte address 0x4 - core index']
  #allocation1 [shape = 'u32[144,128]{1,0:T(1,128)}', space=vmem, size = 0x12000, scoped, tag = 'internal scratch']
  %s0 = inlined_call_operand.hbm [shape: f32[8,128], index: 0, kind: input, shape index: {}]
  %s1 = inlined_call_operand.hbm [shape: f32[4,128,128], index: 1, kind: input, shape index: {}]
  %s2 = inlined_call_operand.vmem [shape: f32[8,1], index: 2, kind: output, shape index: {}]
  %s3 = sld [smem:[#allocation0]]
  $region26: #{tpu_custom_call.1} parent=0
    _
  %s5 = ssub.s32 1, %s3
  %s6 = scalar_select 0, %s5, %s3
  $region1: #{tpu_custom_call.1} parent=0
    #allocation2 [shape = 'u8[4096]{0}', space=vmem, size = 0x1000, scoped, tag = 'input window, operand 0, single buffered']
    #allocation3 [shape = 's32[1]{0}', space=sflag, size = 0x4, scoped, tag = 'scoped memory for tpu_custom_call.1']
    #allocation4 [shape = 'u8[262144]{0}', space=vmem, size = 0x40000, scoped, tag = 'input window, operand 1, single buffered']
    #allocation5 [shape = 's32[1]{0}', space=sflag, size = 0x4, scoped, tag = 'scoped memory for tpu_custom_call.1']
    %7 = vsyncpa [#allocation3], 0
    %8 = vsyncpa [#allocation5], 0
    // Predicated region
    $region2: #{tpu_custom_call.1} parent=1 // pred_check
      _
    $region3: #{tpu_custom_call.1} parent=1 // pred_check_branch
      %10 = sbr.rel (0) target = $region5
    $region4: #{tpu_custom_call.1} parent=1 // pred_region
      %s12 = ssub.s32 128, 128
      %13 = vsyncadd [#allocation3], %s12
      %s15 = sshll.u32 [#allocation2], 4
      %s16 = int_to_ptr.vmem [resolvable:$true] %s15
      %18 = dma.hbm_to_vmem [thread:$0]  %s0, 128, %s16, [#allocation3]
    $region5: #{tpu_custom_call.1} parent=1 // pred_fallthru
      _
    // Predicated region
    $region6: #{tpu_custom_call.1} parent=1 // pred_check
      _
    $region7: #{tpu_custom_call.1} parent=1 // pred_check_branch
      %20 = sbr.rel (0) target = $region9
    $region8: #{tpu_custom_call.1} parent=1 // pred_region
      %s22 = ssub.s32 8192, 8192
      %23 = vsyncadd [#allocation5], %s22
      %s24 = sshll.u32 [#allocation4], 4
      %s25 = int_to_ptr.vmem [resolvable:$true] %s24
      %30 = dma.hbm_to_vmem [thread:$0]  %s1, 8192, %s25, [#allocation5], 128, 128, 8
    $region9: #{tpu_custom_call.1} parent=1 // pred_fallthru
      _
    // Predicated region
    $region10: #{tpu_custom_call.1} parent=1 // pred_check
      _
    $region11: #{tpu_custom_call.1} parent=1 // pred_check_branch
      %32 = sbr.rel (0) target = $region13
    $region12: #{tpu_custom_call.1} parent=1 // pred_region
      %33 = dma.done [#allocation3], 128
    $region13: #{tpu_custom_call.1} parent=1 // pred_fallthru
      _
    // Predicated region
    $region14: #{tpu_custom_call.1} parent=1 // pred_check
      _
    $region15: #{tpu_custom_call.1} parent=1 // pred_check_branch
      %35 = sbr.rel (0) target = $region17
    $region16: #{tpu_custom_call.1} parent=1 // pred_region
      %36 = dma.done [#allocation5], 8192
    $region17: #{tpu_custom_call.1} parent=1 // pred_fallthru
      _
    %v37 = vld [vmem:[#allocation2] sm:$0xff]
    %v38 = vld [vmem:[#allocation4] sm:$0xff]
    %v39 = vld [vmem:[#allocation4 + $0x8] sm:$0xff]
    %v40 = vld [vmem:[#allocation4 + $0x10] sm:$0xff]
    %v41 = vld [vmem:[#allocation4 + $0x18] sm:$0xff]
    %v42 = vld [vmem:[#allocation4 + $0x20] sm:$0xff]
    %v43 = vld [vmem:[#allocation4 + $0x28] sm:$0xff]
    %v44 = vld [vmem:[#allocation4 + $0x30] sm:$0xff]
    %v45 = vld [vmem:[#allocation4 + $0x38] sm:$0xff]
    %v46 = vld [vmem:[#allocation4 + $0x40] sm:$0xff]
    %v47 = vld [vmem:[#allocation4 + $0x48] sm:$0xff]
    %v48 = vld [vmem:[#allocation4 + $0x50] sm:$0xff]
    %v49 = vld [vmem:[#allocation4 + $0x58] sm:$0xff]
    %v50 = vld [vmem:[#allocation4 + $0x60] sm:$0xff]
    %v51 = vld [vmem:[#allocation4 + $0x68] sm:$0xff]
    %v52 = vld [vmem:[#allocation4 + $0x70] sm:$0xff]
    %v53 = vld [vmem:[#allocation4 + $0x78] sm:$0xff]
    %54 = vmatprep.subr.mxu0 0.0
    %55 = vmatpush1.msra.mxu0 %v38
    %56 = vmatprep.subr.mxu0 0.0
    %57 = vmatpush1.msra.mxu0 %v39
    %58 = vmatprep.subr.mxu0 0.0
    %59 = vmatpush1.msra.mxu0 %v40
    %60 = vmatprep.subr.mxu0 0.0
    %61 = vmatpush1.msra.mxu0 %v41
    %62 = vmatprep.subr.mxu0 0.0
    %63 = vmatpush1.msra.mxu0 %v42
    %64 = vmatprep.subr.mxu0 0.0
    %65 = vmatpush1.msra.mxu0 %v43
    %66 = vmatprep.subr.mxu0 0.0
    %67 = vmatpush1.msra.mxu0 %v44
    %68 = vmatprep.subr.mxu0 0.0
    %69 = vmatpush1.msra.mxu0 %v45
    %70 = vmatprep.subr.mxu0 0.0
    %71 = vmatpush1.msra.mxu0 %v46
    %72 = vmatprep.subr.mxu0 0.0
    %73 = vmatpush1.msra.mxu0 %v47
    %74 = vmatprep.subr.mxu0 0.0
    %75 = vmatpush1.msra.mxu0 %v48
    %76 = vmatprep.subr.mxu0 0.0
    %77 = vmatpush1.msra.mxu0 %v49
    %78 = vmatprep.subr.mxu0 0.0
    %79 = vmatpush1.msra.mxu0 %v50
    %80 = vmatprep.subr.mxu0 0.0
    %81 = vmatpush1.msra.mxu0 %v51
    %82 = vmatprep.subr.mxu0 0.0
    %83 = vmatpush1.msra.mxu0 %v52
    %84 = vmatprep.subr.mxu0 0.0
    %85 = vmatpush1.msra.mxu0 %v53
    %86 = vmatprep.subr.mxu0 0.0
    %87 = vmatpush1.msra.mxu0 0.0
    %88 = vmatprep.subr.mxu0 0.0
    %89 = vmatpush1.msra.mxu0 0.0
    %90 = vmatprep.subr.mxu0 0.0
    %91 = vmatpush1.msra.mxu0 0.0
    %92 = vmatprep.subr.mxu0 0.0
    %93 = vmatpush1.msra.mxu0 0.0
    %94 = vmatprep.subr.mxu0 0.0
    %95 = vmatpush1.msra.mxu0 0.0
    %96 = vmatprep.subr.mxu0 0.0
    %97 = vmatpush1.msra.mxu0 0.0
    %98 = vmatprep.subr.mxu0 0.0
    %99 = vmatpush1.msra.mxu0 0.0
    %100 = vmatprep.subr.mxu0 0.0
    %101 = vmatpush1.msra.mxu0 0.0
    %102 = vmatprep.subr.mxu0 0.0
    %103 = vmatpush1.msra.mxu0 0.0
    %104 = vmatprep.subr.mxu0 0.0
    %105 = vmatpush1.msra.mxu0 0.0
    %106 = vmatprep.subr.mxu0 0.0
    %107 = vmatpush1.msra.mxu0 0.0
    %108 = vmatprep.subr.mxu0 0.0
    %109 = vmatpush1.msra.mxu0 0.0
    %110 = vmatprep.subr.mxu0 0.0
    %111 = vmatpush1.msra.mxu0 0.0
    %112 = vmatprep.subr.mxu0 0.0
    %113 = vmatpush1.msra.mxu0 0.0
    %114 = vmatprep.subr.mxu0 0.0
    %115 = vmatpush1.msra.mxu0 0.0
    %116 = vmatprep.subr.mxu0 0.0
    %117 = vmatpush1.msra.mxu0 0.0
    %118 = vmatprep.mubr.f32.mxu0 0.0
    %119 = vmatmul.mubr.f32.gmra.mrb[0].mxu0 %v37
    %v120 = vpop.f32.mrb[0].mxu0
    %v121 = vadd.f32 0.0, %v120
    %v122 = vpop.f32.mrb[0].mxu0
    %123 = vdwg.mxu0
    %v124 = vmax.f32 %v121, 0.0
    %s125 = scalar_lea.vmem [#allocation4], 128
    %v126 = vld [vmem:[%s125] sm:$0xff]
    %v127 = vld [vmem:[%s125 + $0x8] sm:$0xff]
    %v128 = vld [vmem:[%s125 + $0x10] sm:$0xff]
    %v129 = vld [vmem:[%s125 + $0x18] sm:$0xff]
    %v130 = vld [vmem:[%s125 + $0x20] sm:$0xff]
    %v131 = vld [vmem:[%s125 + $0x28] sm:$0xff]
    %v132 = vld [vmem:[%s125 + $0x30] sm:$0xff]
    %v133 = vld [vmem:[%s125 + $0x38] sm:$0xff]
    %v134 = vld [vmem:[%s125 + $0x40] sm:$0xff]
    %v135 = vld [vmem:[%s125 + $0x48] sm:$0xff]
    %v136 = vld [vmem:[%s125 + $0x50] sm:$0xff]
    %v137 = vld [vmem:[%s125 + $0x58] sm:$0xff]
    %v138 = vld [vmem:[%s125 + $0x60] sm:$0xff]
    %v139 = vld [vmem:[%s125 + $0x68] sm:$0xff]
    %v140 = vld [vmem:[%s125 + $0x70] sm:$0xff]
    %v141 = vld [vmem:[%s125 + $0x78] sm:$0xff]
    %142 = vmatprep.subr.mxu0 0.0
    %143 = vmatpush1.msra.mxu0 %v126
    %144 = vmatprep.subr.mxu0 0.0
    %145 = vmatpush1.msra.mxu0 %v127
    %146 = vmatprep.subr.mxu0 0.0
    %147 = vmatpush1.msra.mxu0 %v128
    %148 = vmatprep.subr.mxu0 0.0
    %149 = vmatpush1.msra.mxu0 %v129
    %150 = vmatprep.subr.mxu0 0.0
    %151 = vmatpush1.msra.mxu0 %v130
    %152 = vmatprep.subr.mxu0 0.0
    %153 = vmatpush1.msra.mxu0 %v131
    %154 = vmatprep.subr.mxu0 0.0
    %155 = vmatpush1.msra.mxu0 %v132
    %156 = vmatprep.subr.mxu0 0.0
    %157 = vmatpush1.msra.mxu0 %v133
    %158 = vmatprep.subr.mxu0 0.0
    %159 = vmatpush1.msra.mxu0 %v134
    %160 = vmatprep.subr.mxu0 0.0
    %161 = vmatpush1.msra.mxu0 %v135
    %162 = vmatprep.subr.mxu0 0.0
    %163 = vmatpush1.msra.mxu0 %v136
    %164 = vmatprep.subr.mxu0 0.0
    %165 = vmatpush1.msra.mxu0 %v137
    %166 = vmatprep.subr.mxu0 0.0
    %167 = vmatpush1.msra.mxu0 %v138
    %168 = vmatprep.subr.mxu0 0.0
    %169 = vmatpush1.msra.mxu0 %v139
    %170 = vmatprep.subr.mxu0 0.0
    %171 = vmatpush1.msra.mxu0 %v140
    %172 = vmatprep.subr.mxu0 0.0
    %173 = vmatpush1.msra.mxu0 %v141
    %174 = vmatprep.subr.mxu0 0.0
    %175 = vmatpush1.msra.mxu0 0.0
    %176 = vmatprep.subr.mxu0 0.0
    %177 = vmatpush1.msra.mxu0 0.0
    %178 = vmatprep.subr.mxu0 0.0
    %179 = vmatpush1.msra.mxu0 0.0
    %180 = vmatprep.subr.mxu0 0.0
    %181 = vmatpush1.msra.mxu0 0.0
    %182 = vmatprep.subr.mxu0 0.0
    %183 = vmatpush1.msra.mxu0 0.0
    %184 = vmatprep.subr.mxu0 0.0
    %185 = vmatpush1.msra.mxu0 0.0
    %186 = vmatprep.subr.mxu0 0.0
    %187 = vmatpush1.msra.mxu0 0.0
    %188 = vmatprep.subr.mxu0 0.0
    %189 = vmatpush1.msra.mxu0 0.0
    %190 = vmatprep.subr.mxu0 0.0
    %191 = vmatpush1.msra.mxu0 0.0
    %192 = vmatprep.subr.mxu0 0.0
    %193 = vmatpush1.msra.mxu0 0.0
    %194 = vmatprep.subr.mxu0 0.0
    %195 = vmatpush1.msra.mxu0 0.0
    %196 = vmatprep.subr.mxu0 0.0
    %197 = vmatpush1.msra.mxu0 0.0
    %198 = vmatprep.subr.mxu0 0.0
    %199 = vmatpush1.msra.mxu0 0.0
    %200 = vmatprep.subr.mxu0 0.0
    %201 = vmatpush1.msra.mxu0 0.0
    %202 = vmatprep.subr.mxu0 0.0
    %203 = vmatpush1.msra.mxu0 0.0
    %204 = vmatprep.subr.mxu0 0.0
    %205 = vmatpush1.msra.mxu0 0.0
    %206 = vmatprep.mubr.f32.mxu0 0.0
    %207 = vmatmul.mubr.f32.gmra.mrb[0].mxu0 %v124
    %v208 = vpop.f32.mrb[0].mxu0
    %v209 = vadd.f32 0.0, %v208
    %v210 = vpop.f32.mrb[0].mxu0
    %211 = vdwg.mxu0
    %s212 = scalar_lea.vmem [#allocation4], 256
    %v213 = vld [vmem:[%s212] sm:$0xff]
    %v214 = vld [vmem:[%s212 + $0x8] sm:$0xff]
    %v215 = vld [vmem:[%s212 + $0x10] sm:$0xff]
    %v216 = vld [vmem:[%s212 + $0x18] sm:$0xff]
    %v217 = vld [vmem:[%s212 + $0x20] sm:$0xff]
    %v218 = vld [vmem:[%s212 + $0x28] sm:$0xff]
    %v219 = vld [vmem:[%s212 + $0x30] sm:$0xff]
    %v220 = vld [vmem:[%s212 + $0x38] sm:$0xff]
    %v221 = vld [vmem:[%s212 + $0x40] sm:$0xff]
    %v222 = vld [vmem:[%s212 + $0x48] sm:$0xff]
    %v223 = vld [vmem:[%s212 + $0x50] sm:$0xff]
    %v224 = vld [vmem:[%s212 + $0x58] sm:$0xff]
    %v225 = vld [vmem:[%s212 + $0x60] sm:$0xff]
    %v226 = vld [vmem:[%s212 + $0x68] sm:$0xff]
    %v227 = vld [vmem:[%s212 + $0x70] sm:$0xff]
    %v228 = vld [vmem:[%s212 + $0x78] sm:$0xff]
    %229 = vmatprep.subr.mxu0 0.0
    %230 = vmatpush1.msra.mxu0 %v213
    %231 = vmatprep.subr.mxu0 0.0
    %232 = vmatpush1.msra.mxu0 %v214
    %233 = vmatprep.subr.mxu0 0.0
    %234 = vmatpush1.msra.mxu0 %v215
    %235 = vmatprep.subr.mxu0 0.0
    %236 = vmatpush1.msra.mxu0 %v216
    %237 = vmatprep.subr.mxu0 0.0
    %238 = vmatpush1.msra.mxu0 %v217
    %239 = vmatprep.subr.mxu0 0.0
    %240 = vmatpush1.msra.mxu0 %v218
    %241 = vmatprep.subr.mxu0 0.0
    %242 = vmatpush1.msra.mxu0 %v219
    %243 = vmatprep.subr.mxu0 0.0
    %244 = vmatpush1.msra.mxu0 %v220
    %245 = vmatprep.subr.mxu0 0.0
    %246 = vmatpush1.msra.mxu0 %v221
    %247 = vmatprep.subr.mxu0 0.0
    %248 = vmatpush1.msra.mxu0 %v222
    %249 = vmatprep.subr.mxu0 0.0
    %250 = vmatpush1.msra.mxu0 %v223
    %251 = vmatprep.subr.mxu0 0.0
    %252 = vmatpush1.msra.mxu0 %v224
    %253 = vmatprep.subr.mxu0 0.0
    %254 = vmatpush1.msra.mxu0 %v225
    %255 = vmatprep.subr.mxu0 0.0
    %256 = vmatpush1.msra.mxu0 %v226
    %257 = vmatprep.subr.mxu0 0.0
    %258 = vmatpush1.msra.mxu0 %v227
    %259 = vmatprep.subr.mxu0 0.0
    %260 = vmatpush1.msra.mxu0 %v228
    %261 = vmatprep.subr.mxu0 0.0
    %262 = vmatpush1.msra.mxu0 0.0
    %263 = vmatprep.subr.mxu0 0.0
    %264 = vmatpush1.msra.mxu0 0.0
    %265 = vmatprep.subr.mxu0 0.0
    %266 = vmatpush1.msra.mxu0 0.0
    %267 = vmatprep.subr.mxu0 0.0
    %268 = vmatpush1.msra.mxu0 0.0
    %269 = vmatprep.subr.mxu0 0.0
    %270 = vmatpush1.msra.mxu0 0.0
    %271 = vmatprep.subr.mxu0 0.0
    %272 = vmatpush1.msra.mxu0 0.0
    %273 = vmatprep.subr.mxu0 0.0
    %274 = vmatpush1.msra.mxu0 0.0
    %275 = vmatprep.subr.mxu0 0.0
    %276 = vmatpush1.msra.mxu0 0.0
    %277 = vmatprep.subr.mxu0 0.0
    %278 = vmatpush1.msra.mxu0 0.0
    %279 = vmatprep.subr.mxu0 0.0
    %280 = vmatpush1.msra.mxu0 0.0
    %281 = vmatprep.subr.mxu0 0.0
    %282 = vmatpush1.msra.mxu0 0.0
    %283 = vmatprep.subr.mxu0 0.0
    %284 = vmatpush1.msra.mxu0 0.0
    %285 = vmatprep.subr.mxu0 0.0
    %286 = vmatpush1.msra.mxu0 0.0
    %287 = vmatprep.subr.mxu0 0.0
    %288 = vmatpush1.msra.mxu0 0.0
    %289 = vmatprep.subr.mxu0 0.0
    %290 = vmatpush1.msra.mxu0 0.0
    %291 = vmatprep.subr.mxu0 0.0
    %292 = vmatpush1.msra.mxu0 0.0
    %293 = vmatprep.mubr.f32.mxu0 0.0
    %294 = vmatmul.mubr.f32.gmra.mrb[0].mxu0 %v209
    %v295 = vpop.f32.mrb[0].mxu0
    %v296 = vadd.f32 0.0, %v295
    %v297 = vpop.f32.mrb[0].mxu0
    %298 = vdwg.mxu0
    %v299 = vmax.f32 %v296, 0.0
    %s300 = scalar_lea.vmem [#allocation4], 384
    %v301 = vld [vmem:[%s300] sm:$0xff]
    %v302 = vld [vmem:[%s300 + $0x8] sm:$0xff]
    %v303 = vld [vmem:[%s300 + $0x10] sm:$0xff]
    %v304 = vld [vmem:[%s300 + $0x18] sm:$0xff]
    %v305 = vld [vmem:[%s300 + $0x20] sm:$0xff]
    %v306 = vld [vmem:[%s300 + $0x28] sm:$0xff]
    %v307 = vld [vmem:[%s300 + $0x30] sm:$0xff]
    %v308 = vld [vmem:[%s300 + $0x38] sm:$0xff]
    %v309 = vld [vmem:[%s300 + $0x40] sm:$0xff]
    %v310 = vld [vmem:[%s300 + $0x48] sm:$0xff]
    %v311 = vld [vmem:[%s300 + $0x50] sm:$0xff]
    %v312 = vld [vmem:[%s300 + $0x58] sm:$0xff]
    %v313 = vld [vmem:[%s300 + $0x60] sm:$0xff]
    %v314 = vld [vmem:[%s300 + $0x68] sm:$0xff]
    %v315 = vld [vmem:[%s300 + $0x70] sm:$0xff]
    %v316 = vld [vmem:[%s300 + $0x78] sm:$0xff]
    %317 = vmatprep.subr.mxu0 0.0
    %318 = vmatpush1.msra.mxu0 %v301
    %319 = vmatprep.subr.mxu0 0.0
    %320 = vmatpush1.msra.mxu0 %v302
    %321 = vmatprep.subr.mxu0 0.0
    %322 = vmatpush1.msra.mxu0 %v303
    %323 = vmatprep.subr.mxu0 0.0
    %324 = vmatpush1.msra.mxu0 %v304
    %325 = vmatprep.subr.mxu0 0.0
    %326 = vmatpush1.msra.mxu0 %v305
    %327 = vmatprep.subr.mxu0 0.0
    %328 = vmatpush1.msra.mxu0 %v306
    %329 = vmatprep.subr.mxu0 0.0
    %330 = vmatpush1.msra.mxu0 %v307
    %331 = vmatprep.subr.mxu0 0.0
    %332 = vmatpush1.msra.mxu0 %v308
    %333 = vmatprep.subr.mxu0 0.0
    %334 = vmatpush1.msra.mxu0 %v309
    %335 = vmatprep.subr.mxu0 0.0
    %336 = vmatpush1.msra.mxu0 %v310
    %337 = vmatprep.subr.mxu0 0.0
    %338 = vmatpush1.msra.mxu0 %v311
    %339 = vmatprep.subr.mxu0 0.0
    %340 = vmatpush1.msra.mxu0 %v312
    %341 = vmatprep.subr.mxu0 0.0
    %342 = vmatpush1.msra.mxu0 %v313
    %343 = vmatprep.subr.mxu0 0.0
    %344 = vmatpush1.msra.mxu0 %v314
    %345 = vmatprep.subr.mxu0 0.0
    %346 = vmatpush1.msra.mxu0 %v315
    %347 = vmatprep.subr.mxu0 0.0
    %348 = vmatpush1.msra.mxu0 %v316
    %349 = vmatprep.subr.mxu0 0.0
    %350 = vmatpush1.msra.mxu0 0.0
    %351 = vmatprep.subr.mxu0 0.0
    %352 = vmatpush1.msra.mxu0 0.0
    %353 = vmatprep.subr.mxu0 0.0
    %354 = vmatpush1.msra.mxu0 0.0
    %355 = vmatprep.subr.mxu0 0.0
    %356 = vmatpush1.msra.mxu0 0.0
    %357 = vmatprep.subr.mxu0 0.0
    %358 = vmatpush1.msra.mxu0 0.0
    %359 = vmatprep.subr.mxu0 0.0
    %360 = vmatpush1.msra.mxu0 0.0
    %361 = vmatprep.subr.mxu0 0.0
    %362 = vmatpush1.msra.mxu0 0.0
    %363 = vmatprep.subr.mxu0 0.0
    %364 = vmatpush1.msra.mxu0 0.0
    %365 = vmatprep.subr.mxu0 0.0
    %366 = vmatpush1.msra.mxu0 0.0
    %367 = vmatprep.subr.mxu0 0.0
    %368 = vmatpush1.msra.mxu0 0.0
    %369 = vmatprep.subr.mxu0 0.0
    %370 = vmatpush1.msra.mxu0 0.0
    %371 = vmatprep.subr.mxu0 0.0
    %372 = vmatpush1.msra.mxu0 0.0
    %373 = vmatprep.subr.mxu0 0.0
    %374 = vmatpush1.msra.mxu0 0.0
    %375 = vmatprep.subr.mxu0 0.0
    %376 = vmatpush1.msra.mxu0 0.0
    %377 = vmatprep.subr.mxu0 0.0
    %378 = vmatpush1.msra.mxu0 0.0
    %379 = vmatprep.subr.mxu0 0.0
    %380 = vmatpush1.msra.mxu0 0.0
    %381 = vmatprep.mubr.f32.mxu0 0.0
    %382 = vmatmul.mubr.f32.gmra.mrb[0].mxu0 %v299
    %v383 = vpop.f32.mrb[0].mxu0
    %v384 = vadd.f32 0.0, %v383
    %v385 = vpop.f32.mrb[0].mxu0
    %386 = vdwg.mxu0
    %v387 = vmul.f32 %v384, %v209
    %388 = vadd.xlane.f32.xlu0 %v387
    %v389 = vpop.xlane.xlu0 %388
    %vm390 = vcmask 7168
    %391 = vst.msk [vmem:[%s2] sm:$0xff] %vm390, %v389
    // Predicated region
    $region18: #{tpu_custom_call.1} parent=1 // pred_check
      _
    $region19: #{tpu_custom_call.1} parent=1 // pred_check_branch
      %393 = sbr.rel (0) target = $region21
    $region20: #{tpu_custom_call.1} parent=1 // pred_region
      _
    $region21: #{tpu_custom_call.1} parent=1 // pred_fallthru
      _
    // Predicated region
    $region22: #{tpu_custom_call.1} parent=1 // pred_check
      _
    $region23: #{tpu_custom_call.1} parent=1 // pred_check_branch
      %395 = sbr.rel (0) target = $region25
    $region24: #{tpu_custom_call.1} parent=1 // pred_region
      _
    $region25: #{tpu_custom_call.1} parent=1 // pred_fallthru
      _
    %396 = vsyncpa [#allocation3], 1
    %397 = vsyncpa [#allocation5], 1

</llo_original>
